<compile_context>
chip_gen: v6e
topology: v6e:2x2x1
jax: 0.10.0
libtpu: 0.0.40
codegen_flags: <defaults>
</compile_context>

<pallas_src>
import math
import functools

import jax
import jax.numpy as jnp
from jax.experimental import pallas as pl
from jax.experimental.pallas import tpu as pltpu


def _round_up(x, m):
    return ((x + m - 1) // m) * m


def _pad2(a, rows, cols):
    return jnp.pad(a, ((0, rows - a.shape[0]), (0, cols - a.shape[1])))


def _gru_cell_kernel(lhs_ref, w_ref, o_ref, *, hp):
    """One fused MXU matmul + gate elementwise math.

    lhs_ref: (TN, Kp) = [h_prev (Hp lanes) | x (I) | 1 | 0-pad], f32
    w_ref:   (Kp, 4*Hp) column blocks [r | z | n_ih | n_hh], biases folded in
    o_ref:   (TN, Hp) new hidden state (padded lanes are don't-care)
    """
    lhs = lhs_ref[...]
    # Single MXU call:
    #   v[:, 0:Hp]      = x@W_ir.T + h@W_hr.T + b_ir + b_hr
    #   v[:, Hp:2Hp]    = x@W_iz.T + h@W_hz.T + b_iz + b_hz
    #   v[:, 2Hp:3Hp]   = x@W_in.T + b_in
    #   v[:, 3Hp:4Hp]   = h@W_hn.T + b_hn
    v = jnp.dot(lhs, w_ref[...], preferred_element_type=jnp.float32)

    h = lhs[:, 0:hp]                       # lane-aligned view of h_prev

    r = jax.nn.sigmoid(v[:, 0:hp])         # EUP
    z = jax.nn.sigmoid(v[:, hp:2 * hp])    # EUP
    n = jnp.tanh(v[:, 2 * hp:3 * hp] + r * v[:, 3 * hp:4 * hp])  # VPU + EUP

    h_new = (1.0 - z) * n + z * h          # VPU
    o_ref[...] = h_new.astype(o_ref.dtype)


@jax.jit
def gru_cell(x, h_prev, weight_ih, weight_hh, bias_ih=None, bias_hh=None):
    """GRUCell forward.

    x: (N, I) or (I,); h_prev: (N, H), (H,), or None (zeros).
    weight_ih: (3H, I); weight_hh: (3H, H); biases: (3H,) or None.
    """
    is_batched = x.ndim == 2
    if not is_batched:
        x = x[None, :]
        if h_prev is not None:
            h_prev = h_prev[None, :]

    N, I = x.shape
    H = weight_hh.shape[1]
    out_dtype = x.dtype
    cdt = jnp.float32  # compute dtype (f32 everywhere; matches the spec)

    if h_prev is None:
        h_prev = jnp.zeros((N, H), cdt)
    if bias_ih is None:
        bias_ih = jnp.zeros((3 * H,), cdt)
    if bias_hh is None:
        bias_hh = jnp.zeros((3 * H,), cdt)

    # ---- lane/sublane-aligned padded sizes -----------------------------------
    Hp = _round_up(H, 128)            # each gate gets its own 128-lane block
    Kp = _round_up(Hp + I + 1, 128)   # contraction dim ([h | x | 1]), 128-aligned
    Np = _round_up(N, 8)              # full sublanes
    TN = min(Np, 128)                 # batch tile (rows)
    Np = _round_up(Np, TN)

    # ---- pack fused weight (Kp, 4*Hp) — glue-only, precomputed once per jit ---
    Wih = weight_ih.astype(cdt)       # (3H, I)
    Whh = weight_hh.astype(cdt)       # (3H, H)
    b_ih = bias_ih.astype(cdt)
    b_hh = bias_hh.astype(cdt)

    # h-driven rows (first H rows): [W_hr.T | W_hz.T | 0 | W_hn.T]
    h_rows = jnp.concatenate([
        _pad2(Whh[0:H].T, H, Hp),
        _pad2(Whh[H:2 * H].T, H, Hp),
        jnp.zeros((H, Hp), cdt),
        _pad2(Whh[2 * H:3 * H].T, H, Hp),
    ], axis=1)                                                    # (H, 4*Hp)
    # x-driven rows: [W_ir.T | W_iz.T | W_in.T | 0]
    x_rows = jnp.concatenate([
        _pad2(Wih[0:H].T, I, Hp),
        _pad2(Wih[H:2 * H].T, I, Hp),
        _pad2(Wih[2 * H:3 * H].T, I, Hp),
        jnp.zeros((I, Hp), cdt),
    ], axis=1)                                                    # (I, 4*Hp)
    # bias row, driven by the constant-1 LHS column:
    #   [b_ir+b_hr | b_iz+b_hz | b_in | b_hn]
    _padv = lambda b: jnp.pad(b, (0, Hp - H))
    b_row = jnp.concatenate([
        _padv(b_ih[0:H] + b_hh[0:H]),
        _padv(b_ih[H:2 * H] + b_hh[H:2 * H]),
        _padv(b_ih[2 * H:3 * H]),
        _padv(b_hh[2 * H:3 * H]),
    ])[None, :]                                                   # (1, 4*Hp)

    w = jnp.concatenate([_pad2(h_rows, Hp, 4 * Hp), x_rows, b_row], axis=0)
    w = _pad2(w, Kp, 4 * Hp)                                      # (Kp, 4*Hp)

    # ---- pack fused LHS (Np, Kp) = [h | x | 1 | 0-pad] ------------------------
    lhs = jnp.concatenate([
        _pad2(h_prev.astype(cdt), N, Hp),
        x.astype(cdt),
        jnp.ones((N, 1), cdt),
    ], axis=1)                                                    # (N, Hp+I+1)
    lhs = _pad2(lhs, Np, Kp)                                      # (Np, Kp)

    grid = (Np // TN,)
    out = pl.pallas_call(
        functools.partial(_gru_cell_kernel, hp=Hp),
        out_shape=jax.ShapeDtypeStruct((Np, Hp), out_dtype),
        grid_spec=pltpu.PrefetchScalarGridSpec(
            num_scalar_prefetch=0,
            grid=grid,
            in_specs=[
                pl.BlockSpec((TN, Kp), lambda i: (i, 0)),       # batch-tiled LHS
                pl.BlockSpec((Kp, 4 * Hp), lambda i: (0, 0)),   # weight resident
            ],
            out_specs=pl.BlockSpec((TN, Hp), lambda i: (i, 0)),
        ),
        compiler_params=pltpu.CompilerParams(
            dimension_semantics=("parallel",)),
    )(lhs, w)

    h_new = out[0:N, 0:H].astype(out_dtype)
    if not is_batched:
        h_new = h_new[0]
    return h_new


def _reference_gru(x, h_prev, weight_ih, weight_hh, bias_ih, bias_hh):
    """Pure-JAX reference matching the PyTorch forward exactly."""
    v1 = x @ weight_ih.T + bias_ih
    v2 = h_prev @ weight_hh.T + bias_hh
    H = h_prev.shape[-1]
    r = jax.nn.sigmoid(v1[..., :H] + v2[..., :H])
    z = jax.nn.sigmoid(v1[..., H:2 * H] + v2[..., H:2 * H])
    n = jnp.tanh(v1[..., 2 * H:] + r * v2[..., 2 * H:])
    return (1.0 - z) * n + z * h_prev


if __name__ == "__main__":
    batch = 2
    input_size = 16
    hidden_size = 32

    key = jax.random.PRNGKey(0)
    k_x, k_h, k_wih, k_whh, k_bih, k_bhh = jax.random.split(key, 6)

    # Deterministic init matching RNNCellBase: U(-sqrt(1/H), sqrt(1/H)).
    bound = math.sqrt(1.0 / hidden_size)
    weight_ih = jax.random.uniform(
        k_wih, (3 * hidden_size, input_size), jnp.float32, -bound, bound)
    weight_hh = jax.random.uniform(
        k_whh, (3 * hidden_size, hidden_size), jnp.float32, -bound, bound)
    bias_ih = jax.random.uniform(
        k_bih, (3 * hidden_size,), jnp.float32, -bound, bound)
    bias_hh = jax.random.uniform(
        k_bhh, (3 * hidden_size,), jnp.float32, -bound, bound)

    x = jax.random.normal(k_x, (batch, input_size), jnp.float32)
    h_prev = jax.random.normal(k_h, (batch, hidden_size), jnp.float32)

    # Batched path.
    h_new = gru_cell(x, h_prev, weight_ih, weight_hh, bias_ih, bias_hh)
    h_new = jax.block_until_ready(h_new)
    h_ref = _reference_gru(x, h_prev, weight_ih, weight_hh, bias_ih, bias_hh)
    assert h_new.shape == (batch, hidden_size)
    assert jnp.allclose(h_new, h_ref, atol=1e-5, rtol=1e-5), "batched mismatch"

    # Unbatched path (x: (I,), h_prev: (H,)).
    h1 = gru_cell(x[0], h_prev[0], weight_ih, weight_hh, bias_ih, bias_hh)
    h1 = jax.block_until_ready(h1)
    assert h1.shape == (hidden_size,)
    assert jnp.allclose(h1, h_ref[0], atol=1e-5, rtol=1e-5), "unbatched mismatch"

    # h_prev=None path (zeros initial state).
    h0 = gru_cell(x, None, weight_ih, weight_hh, bias_ih, bias_hh)
    h0 = jax.block_until_ready(h0)
    h0_ref = _reference_gru(x, jnp.zeros((batch, hidden_size), jnp.float32),
                            weight_ih, weight_hh, bias_ih, bias_hh)
    assert jnp.allclose(h0, h0_ref, atol=1e-5, rtol=1e-5), "h_prev=None mismatch"

    # No-bias path.
    hb = gru_cell(x, h_prev, weight_ih, weight_hh, None, None)
    hb = jax.block_until_ready(hb)
    hb_ref = _reference_gru(x, h_prev, weight_ih, weight_hh,
                            jnp.zeros((3 * hidden_size,), jnp.float32),
                            jnp.zeros((3 * hidden_size,), jnp.float32))
    assert jnp.allclose(hb, hb_ref, atol=1e-5, rtol=1e-5), "no-bias mismatch"

    print("KERNEL_OK")
</pallas_src>

<mosaic_0001>
module attributes {stable_mosaic.version = 11 : i64} {
  func.func @_gru_cell_kernel(%arg0: i32, %arg1: memref<8x256xf32, #tpu.memory_space<vmem>>, %arg2: memref<256x512xf32, #tpu.memory_space<vmem>>, %arg3: memref<8x128xf32, #tpu.memory_space<vmem>>) attributes {dimension_semantics = [#tpu.dimension_semantics<parallel>], iteration_bounds = array<i64: 1>, scalar_prefetch = 0 : i64, scratch_operands = 0 : i64, tpu.core_type = #tpu.core_type<tc>, window_params = [{transform_indices = @transform_0, window_bounds = array<i64: 8, 256>}, {pipeline_mode = #tpu.pipeline_mode<synchronous>, transform_indices = @transform_1, window_bounds = array<i64: 256, 512>}, {transform_indices = @transform_2, window_bounds = array<i64: 8, 128>}]} {
    %c0 = arith.constant 0 : index
    %c0_0 = arith.constant 0 : index
    %0 = vector.load %arg1[%c0, %c0_0] : memref<8x256xf32, #tpu.memory_space<vmem>>, vector<8x256xf32>
    %c0_1 = arith.constant 0 : index
    %c0_2 = arith.constant 0 : index
    %1 = vector.load %arg2[%c0_1, %c0_2] : memref<256x512xf32, #tpu.memory_space<vmem>>, vector<256x512xf32>
    %cst = arith.constant dense<0.000000e+00> : vector<8x512xf32>
    %2 = tpu.matmul %0, %1, %cst {dimension_numbers = #tpu.dot_dimension_numbers<[1], [0], [0], [1], [0, 0, 1, 1], [], []>} : vector<8x256xf32>, vector<256x512xf32>, vector<8x512xf32> -> vector<8x512xf32>
    %3 = vector.extract_strided_slice %0 {offsets = [0, 0], sizes = [8, 128], strides = [1, 1]} : vector<8x256xf32> to vector<8x128xf32>
    %4 = vector.extract_strided_slice %2 {offsets = [0, 0], sizes = [8, 128], strides = [1, 1]} : vector<8x512xf32> to vector<8x128xf32>
    %5 = arith.negf %4 : vector<8x128xf32>
    %6 = math.exp %5 : vector<8x128xf32>
    %cst_3 = arith.constant 1.000000e+00 : f32
    %7 = vector.broadcast %cst_3 : f32 to vector<8x128xf32>
    %8 = arith.addf %7, %6 : vector<8x128xf32>
    %9 = arith.divf %7, %8 : vector<8x128xf32>
    %10 = vector.extract_strided_slice %2 {offsets = [0, 128], sizes = [8, 128], strides = [1, 1]} : vector<8x512xf32> to vector<8x128xf32>
    %11 = arith.negf %10 : vector<8x128xf32>
    %12 = math.exp %11 : vector<8x128xf32>
    %cst_4 = arith.constant 1.000000e+00 : f32
    %13 = vector.broadcast %cst_4 : f32 to vector<8x128xf32>
    %14 = arith.addf %13, %12 : vector<8x128xf32>
    %15 = arith.divf %13, %14 : vector<8x128xf32>
    %16 = vector.extract_strided_slice %2 {offsets = [0, 256], sizes = [8, 128], strides = [1, 1]} : vector<8x512xf32> to vector<8x128xf32>
    %17 = vector.extract_strided_slice %2 {offsets = [0, 384], sizes = [8, 128], strides = [1, 1]} : vector<8x512xf32> to vector<8x128xf32>
    %18 = arith.mulf %9, %17 : vector<8x128xf32>
    %19 = arith.addf %16, %18 : vector<8x128xf32>
    %20 = math.tanh %19 : vector<8x128xf32>
    %cst_5 = arith.constant 1.000000e+00 : f32
    %21 = vector.broadcast %cst_5 : f32 to vector<8x128xf32>
    %22 = arith.subf %21, %15 : vector<8x128xf32>
    %23 = arith.mulf %22, %20 : vector<8x128xf32>
    %24 = arith.mulf %15, %3 : vector<8x128xf32>
    %25 = arith.addf %23, %24 : vector<8x128xf32>
    %c0_6 = arith.constant 0 : index
    %c0_7 = arith.constant 0 : index
    %26 = vector.load %arg3[%c0_6, %c0_7] : memref<8x128xf32, #tpu.memory_space<vmem>>, vector<8x128xf32>
    tpu.vector_store %arg3[%c0_6, %c0_7], %25 {strides = array<i32>} : memref<8x128xf32, #tpu.memory_space<vmem>>, vector<8x128xf32>,
    return
  }
  func.func @transform_0(%arg0: i32) -> (i32, i32) {
    %c0_i32 = arith.constant 0 : i32
    %c0_i32_0 = arith.constant 0 : i32
    return %arg0, %c0_i32 : i32, i32
  }
  func.func @transform_1(%arg0: i32) -> (i32, i32) {
    %c0_i32 = arith.constant 0 : i32
    %c0_i32_0 = arith.constant 0 : i32
    %c0_i32_1 = arith.constant 0 : i32
    return %c0_i32, %c0_i32_0 : i32, i32
  }
  func.func @transform_2(%arg0: i32) -> (i32, i32) {
    %c0_i32 = arith.constant 0 : i32
    %c0_i32_0 = arith.constant 0 : i32
    return %arg0, %c0_i32 : i32, i32
  }
}

</mosaic_0001>

<llo_original>
// kernel: gru_cell.1
$region0: #{gru_cell.1}
  #allocation0 [shape = 'u32[]', space=smem, size = 0x4, offset = 0x4, fixed_abs, tag = 'smem constant byte address 0x4 - core index']
  #allocation1 [shape = 'u32[144,128]{1,0:T(1,128)}', space=vmem, size = 0x12000, scoped, tag = 'internal scratch']
  %s0 = inlined_call_operand.vmem [shape: f32[8,256], index: 0, kind: input, shape index: {}]
  %s1 = inlined_call_operand.vmem [shape: f32[256,512], index: 1, kind: input, shape index: {}]
  %s2 = inlined_call_operand.vmem [shape: f32[8,128], index: 2, kind: output, shape index: {}]
  %s3 = sld [smem:[#allocation0]]
  $region18: #{gru_cell.1} parent=0
    _
  %s5 = ssub.s32 1, %s3
  %s6 = scalar_select 0, %s5, %s3
  // Predicated region
  $region2: #{gru_cell.1} parent=0 // pred_check
    _
  $region3: #{gru_cell.1} parent=0 // pred_check_branch
    %8 = sbr.rel (0) target = $region5
  $region4: #{gru_cell.1} parent=0 // pred_region
    _
  $region5: #{gru_cell.1} parent=0 // pred_fallthru
    _
  // Predicated region
  $region6: #{gru_cell.1} parent=0 // pred_check
    _
  $region7: #{gru_cell.1} parent=0 // pred_check_branch
    %10 = sbr.rel (0) target = $region9
  $region8: #{gru_cell.1} parent=0 // pred_region
    _
  $region9: #{gru_cell.1} parent=0 // pred_fallthru
    _
  %v11 = vld [vmem:[%s0] sm:$0xff]
  %v12 = vld [vmem:[%s0 + $0x8] sm:$0xff]
  %v13 = vld [vmem:[%s1] sm:$0xff]
  %v14 = vld [vmem:[%s1 + $0x8] sm:$0xff]
  %v15 = vld [vmem:[%s1 + $0x10] sm:$0xff]
  %v16 = vld [vmem:[%s1 + $0x18] sm:$0xff]
  %v17 = vld [vmem:[%s1 + $0x20] sm:$0xff]
  %v18 = vld [vmem:[%s1 + $0x28] sm:$0xff]
  %v19 = vld [vmem:[%s1 + $0x30] sm:$0xff]
  %v20 = vld [vmem:[%s1 + $0x38] sm:$0xff]
  %v21 = vld [vmem:[%s1 + $0x40] sm:$0xff]
  %v22 = vld [vmem:[%s1 + $0x48] sm:$0xff]
  %v23 = vld [vmem:[%s1 + $0x50] sm:$0xff]
  %v24 = vld [vmem:[%s1 + $0x58] sm:$0xff]
  %v25 = vld [vmem:[%s1 + $0x60] sm:$0xff]
  %v26 = vld [vmem:[%s1 + $0x68] sm:$0xff]
  %v27 = vld [vmem:[%s1 + $0x70] sm:$0xff]
  %v28 = vld [vmem:[%s1 + $0x78] sm:$0xff]
  %v29 = vld [vmem:[%s1 + $0x80] sm:$0xff]
  %v30 = vld [vmem:[%s1 + $0x88] sm:$0xff]
  %v31 = vld [vmem:[%s1 + $0x90] sm:$0xff]
  %v32 = vld [vmem:[%s1 + $0x98] sm:$0xff]
  %v33 = vld [vmem:[%s1 + $0xa0] sm:$0xff]
  %v34 = vld [vmem:[%s1 + $0xa8] sm:$0xff]
  %v35 = vld [vmem:[%s1 + $0xb0] sm:$0xff]
  %v36 = vld [vmem:[%s1 + $0xb8] sm:$0xff]
  %v37 = vld [vmem:[%s1 + $0xc0] sm:$0xff]
  %v38 = vld [vmem:[%s1 + $0xc8] sm:$0xff]
  %v39 = vld [vmem:[%s1 + $0xd0] sm:$0xff]
  %v40 = vld [vmem:[%s1 + $0xd8] sm:$0xff]
  %v41 = vld [vmem:[%s1 + $0xe0] sm:$0xff]
  %v42 = vld [vmem:[%s1 + $0xe8] sm:$0xff]
  %v43 = vld [vmem:[%s1 + $0xf0] sm:$0xff]
  %v44 = vld [vmem:[%s1 + $0xf8] sm:$0xff]
  %v45 = vld [vmem:[%s1 + $0x100] sm:$0xff]
  %v46 = vld [vmem:[%s1 + $0x108] sm:$0xff]
  %v47 = vld [vmem:[%s1 + $0x110] sm:$0xff]
  %v48 = vld [vmem:[%s1 + $0x118] sm:$0xff]
  %v49 = vld [vmem:[%s1 + $0x120] sm:$0xff]
  %v50 = vld [vmem:[%s1 + $0x128] sm:$0xff]
  %v51 = vld [vmem:[%s1 + $0x130] sm:$0xff]
  %v52 = vld [vmem:[%s1 + $0x138] sm:$0xff]
  %v53 = vld [vmem:[%s1 + $0x140] sm:$0xff]
  %v54 = vld [vmem:[%s1 + $0x148] sm:$0xff]
  %v55 = vld [vmem:[%s1 + $0x150] sm:$0xff]
  %v56 = vld [vmem:[%s1 + $0x158] sm:$0xff]
  %v57 = vld [vmem:[%s1 + $0x160] sm:$0xff]
  %v58 = vld [vmem:[%s1 + $0x168] sm:$0xff]
  %v59 = vld [vmem:[%s1 + $0x170] sm:$0xff]
  %v60 = vld [vmem:[%s1 + $0x178] sm:$0xff]
  %v61 = vld [vmem:[%s1 + $0x180] sm:$0xff]
  %v62 = vld [vmem:[%s1 + $0x188] sm:$0xff]
  %v63 = vld [vmem:[%s1 + $0x190] sm:$0xff]
  %v64 = vld [vmem:[%s1 + $0x198] sm:$0xff]
  %v65 = vld [vmem:[%s1 + $0x1a0] sm:$0xff]
  %v66 = vld [vmem:[%s1 + $0x1a8] sm:$0xff]
  %v67 = vld [vmem:[%s1 + $0x1b0] sm:$0xff]
  %v68 = vld [vmem:[%s1 + $0x1b8] sm:$0xff]
  %v69 = vld [vmem:[%s1 + $0x1c0] sm:$0xff]
  %v70 = vld [vmem:[%s1 + $0x1c8] sm:$0xff]
  %v71 = vld [vmem:[%s1 + $0x1d0] sm:$0xff]
  %v72 = vld [vmem:[%s1 + $0x1d8] sm:$0xff]
  %v73 = vld [vmem:[%s1 + $0x1e0] sm:$0xff]
  %v74 = vld [vmem:[%s1 + $0x1e8] sm:$0xff]
  %v75 = vld [vmem:[%s1 + $0x1f0] sm:$0xff]
  %v76 = vld [vmem:[%s1 + $0x1f8] sm:$0xff]
  %v77 = vld [vmem:[%s1 + $0x200] sm:$0xff]
  %v78 = vld [vmem:[%s1 + $0x208] sm:$0xff]
  %v79 = vld [vmem:[%s1 + $0x210] sm:$0xff]
  %v80 = vld [vmem:[%s1 + $0x218] sm:$0xff]
  %v81 = vld [vmem:[%s1 + $0x220] sm:$0xff]
  %v82 = vld [vmem:[%s1 + $0x228] sm:$0xff]
  %v83 = vld [vmem:[%s1 + $0x230] sm:$0xff]
  %v84 = vld [vmem:[%s1 + $0x238] sm:$0xff]
  %v85 = vld [vmem:[%s1 + $0x240] sm:$0xff]
  %v86 = vld [vmem:[%s1 + $0x248] sm:$0xff]
  %v87 = vld [vmem:[%s1 + $0x250] sm:$0xff]
  %v88 = vld [vmem:[%s1 + $0x258] sm:$0xff]
  %v89 = vld [vmem:[%s1 + $0x260] sm:$0xff]
  %v90 = vld [vmem:[%s1 + $0x268] sm:$0xff]
  %v91 = vld [vmem:[%s1 + $0x270] sm:$0xff]
  %v92 = vld [vmem:[%s1 + $0x278] sm:$0xff]
  %v93 = vld [vmem:[%s1 + $0x280] sm:$0xff]
  %v94 = vld [vmem:[%s1 + $0x288] sm:$0xff]
  %v95 = vld [vmem:[%s1 + $0x290] sm:$0xff]
  %v96 = vld [vmem:[%s1 + $0x298] sm:$0xff]
  %v97 = vld [vmem:[%s1 + $0x2a0] sm:$0xff]
  %v98 = vld [vmem:[%s1 + $0x2a8] sm:$0xff]
  %v99 = vld [vmem:[%s1 + $0x2b0] sm:$0xff]
  %v100 = vld [vmem:[%s1 + $0x2b8] sm:$0xff]
  %v101 = vld [vmem:[%s1 + $0x2c0] sm:$0xff]
  %v102 = vld [vmem:[%s1 + $0x2c8] sm:$0xff]
  %v103 = vld [vmem:[%s1 + $0x2d0] sm:$0xff]
  %v104 = vld [vmem:[%s1 + $0x2d8] sm:$0xff]
  %v105 = vld [vmem:[%s1 + $0x2e0] sm:$0xff]
  %v106 = vld [vmem:[%s1 + $0x2e8] sm:$0xff]
  %v107 = vld [vmem:[%s1 + $0x2f0] sm:$0xff]
  %v108 = vld [vmem:[%s1 + $0x2f8] sm:$0xff]
  %v109 = vld [vmem:[%s1 + $0x300] sm:$0xff]
  %v110 = vld [vmem:[%s1 + $0x308] sm:$0xff]
  %v111 = vld [vmem:[%s1 + $0x310] sm:$0xff]
  %v112 = vld [vmem:[%s1 + $0x318] sm:$0xff]
  %v113 = vld [vmem:[%s1 + $0x320] sm:$0xff]
  %v114 = vld [vmem:[%s1 + $0x328] sm:$0xff]
  %v115 = vld [vmem:[%s1 + $0x330] sm:$0xff]
  %v116 = vld [vmem:[%s1 + $0x338] sm:$0xff]
  %v117 = vld [vmem:[%s1 + $0x340] sm:$0xff]
  %v118 = vld [vmem:[%s1 + $0x348] sm:$0xff]
  %v119 = vld [vmem:[%s1 + $0x350] sm:$0xff]
  %v120 = vld [vmem:[%s1 + $0x358] sm:$0xff]
  %v121 = vld [vmem:[%s1 + $0x360] sm:$0xff]
  %v122 = vld [vmem:[%s1 + $0x368] sm:$0xff]
  %v123 = vld [vmem:[%s1 + $0x370] sm:$0xff]
  %v124 = vld [vmem:[%s1 + $0x378] sm:$0xff]
  %v125 = vld [vmem:[%s1 + $0x380] sm:$0xff]
  %v126 = vld [vmem:[%s1 + $0x388] sm:$0xff]
  %v127 = vld [vmem:[%s1 + $0x390] sm:$0xff]
  %v128 = vld [vmem:[%s1 + $0x398] sm:$0xff]
  %v129 = vld [vmem:[%s1 + $0x3a0] sm:$0xff]
  %v130 = vld [vmem:[%s1 + $0x3a8] sm:$0xff]
  %v131 = vld [vmem:[%s1 + $0x3b0] sm:$0xff]
  %v132 = vld [vmem:[%s1 + $0x3b8] sm:$0xff]
  %v133 = vld [vmem:[%s1 + $0x3c0] sm:$0xff]
  %v134 = vld [vmem:[%s1 + $0x3c8] sm:$0xff]
  %v135 = vld [vmem:[%s1 + $0x3d0] sm:$0xff]
  %v136 = vld [vmem:[%s1 + $0x3d8] sm:$0xff]
  %v137 = vld [vmem:[%s1 + $0x3e0] sm:$0xff]
  %v138 = vld [vmem:[%s1 + $0x3e8] sm:$0xff]
  %v139 = vld [vmem:[%s1 + $0x3f0] sm:$0xff]
  %v140 = vld [vmem:[%s1 + $0x3f8] sm:$0xff]
  %141 = vmatprep.subr.mxu0 %v74
  %142 = vmatpush1.msra.mxu0 %v73
  %143 = vmatprep.subr.mxu0 %v70
  %144 = vmatpush1.msra.mxu0 %v69
  %145 = vmatprep.subr.mxu0 %v66
  %146 = vmatpush1.msra.mxu0 %v65
  %147 = vmatprep.subr.mxu0 %v62
  %148 = vmatpush1.msra.mxu0 %v61
  %149 = vmatprep.subr.mxu0 %v58
  %150 = vmatpush1.msra.mxu0 %v57
  %151 = vmatprep.subr.mxu0 %v54
  %152 = vmatpush1.msra.mxu0 %v53
  %153 = vmatprep.subr.mxu0 %v50
  %154 = vmatpush1.msra.mxu0 %v49
  %155 = vmatprep.subr.mxu0 %v46
  %156 = vmatpush1.msra.mxu0 %v45
  %157 = vmatprep.subr.mxu0 %v42
  %158 = vmatpush1.msra.mxu0 %v41
  %159 = vmatprep.subr.mxu0 %v38
  %160 = vmatpush1.msra.mxu0 %v37
  %161 = vmatprep.subr.mxu0 %v34
  %162 = vmatpush1.msra.mxu0 %v33
  %163 = vmatprep.subr.mxu0 %v30
  %164 = vmatpush1.msra.mxu0 %v29
  %165 = vmatprep.subr.mxu0 %v26
  %166 = vmatpush1.msra.mxu0 %v25
  %167 = vmatprep.subr.mxu0 %v22
  %168 = vmatpush1.msra.mxu0 %v21
  %169 = vmatprep.subr.mxu0 %v18
  %170 = vmatpush1.msra.mxu0 %v17
  %171 = vmatprep.subr.mxu0 %v14
  %172 = vmatpush1.msra.mxu0 %v13
  %173 = vmatprep.subr.mxu0 %v138
  %174 = vmatpush2.msra.mxu0 %v137
  %175 = vmatprep.subr.mxu0 %v134
  %176 = vmatpush2.msra.mxu0 %v133
  %177 = vmatprep.subr.mxu0 %v130
  %178 = vmatpush2.msra.mxu0 %v129
  %179 = vmatprep.subr.mxu0 %v126
  %180 = vmatpush2.msra.mxu0 %v125
  %181 = vmatprep.subr.mxu0 %v122
  %182 = vmatpush2.msra.mxu0 %v121
  %183 = vmatprep.subr.mxu0 %v118
  %184 = vmatpush2.msra.mxu0 %v117
  %185 = vmatprep.subr.mxu0 %v114
  %186 = vmatpush2.msra.mxu0 %v113
  %187 = vmatprep.subr.mxu0 %v110
  %188 = vmatpush2.msra.mxu0 %v109
  %189 = vmatprep.subr.mxu0 %v106
  %190 = vmatpush2.msra.mxu0 %v105
  %191 = vmatprep.subr.mxu0 %v102
  %192 = vmatpush2.msra.mxu0 %v101
  %193 = vmatprep.subr.mxu0 %v98
  %194 = vmatpush2.msra.mxu0 %v97
  %195 = vmatprep.subr.mxu0 %v94
  %196 = vmatpush2.msra.mxu0 %v93
  %197 = vmatprep.subr.mxu0 %v90
  %198 = vmatpush2.msra.mxu0 %v89
  %199 = vmatprep.subr.mxu0 %v86
  %200 = vmatpush2.msra.mxu0 %v85
  %201 = vmatprep.subr.mxu0 %v82
  %202 = vmatpush2.msra.mxu0 %v81
  %203 = vmatprep.subr.mxu0 %v78
  %204 = vmatpush2.msra.mxu0 %v77
  %205 = vmatprep.mubr.f32.mxu0 %v12
  %206 = vmatmul.mubr.f32.gmra.mxu0 %v11
  %v207 = vpop.f32.mrf.mxu0
  %v208 = vadd.f32 0.0, %v207
  %v209 = vpop.f32.mrf.mxu0
  %v210 = vadd.f32 0.0, %v209
  %211 = vdwg.mxu0
  %212 = vmatprep.subr.mxu0 %v76
  %213 = vmatpush1.msra.mxu0 %v75
  %214 = vmatprep.subr.mxu0 %v72
  %215 = vmatpush1.msra.mxu0 %v71
  %216 = vmatprep.subr.mxu0 %v68
  %217 = vmatpush1.msra.mxu0 %v67
  %218 = vmatprep.subr.mxu0 %v64
  %219 = vmatpush1.msra.mxu0 %v63
  %220 = vmatprep.subr.mxu0 %v60
  %221 = vmatpush1.msra.mxu0 %v59
  %222 = vmatprep.subr.mxu0 %v56
  %223 = vmatpush1.msra.mxu0 %v55
  %224 = vmatprep.subr.mxu0 %v52
  %225 = vmatpush1.msra.mxu0 %v51
  %226 = vmatprep.subr.mxu0 %v48
  %227 = vmatpush1.msra.mxu0 %v47
  %228 = vmatprep.subr.mxu0 %v44
  %229 = vmatpush1.msra.mxu0 %v43
  %230 = vmatprep.subr.mxu0 %v40
  %231 = vmatpush1.msra.mxu0 %v39
  %232 = vmatprep.subr.mxu0 %v36
  %233 = vmatpush1.msra.mxu0 %v35
  %234 = vmatprep.subr.mxu0 %v32
  %235 = vmatpush1.msra.mxu0 %v31
  %236 = vmatprep.subr.mxu0 %v28
  %237 = vmatpush1.msra.mxu0 %v27
  %238 = vmatprep.subr.mxu0 %v24
  %239 = vmatpush1.msra.mxu0 %v23
  %240 = vmatprep.subr.mxu0 %v20
  %241 = vmatpush1.msra.mxu0 %v19
  %242 = vmatprep.subr.mxu0 %v16
  %243 = vmatpush1.msra.mxu0 %v15
  %244 = vmatprep.subr.mxu0 %v140
  %245 = vmatpush2.msra.mxu0 %v139
  %246 = vmatprep.subr.mxu0 %v136
  %247 = vmatpush2.msra.mxu0 %v135
  %248 = vmatprep.subr.mxu0 %v132
  %249 = vmatpush2.msra.mxu0 %v131
  %250 = vmatprep.subr.mxu0 %v128
  %251 = vmatpush2.msra.mxu0 %v127
  %252 = vmatprep.subr.mxu0 %v124
  %253 = vmatpush2.msra.mxu0 %v123
  %254 = vmatprep.subr.mxu0 %v120
  %255 = vmatpush2.msra.mxu0 %v119
  %256 = vmatprep.subr.mxu0 %v116
  %257 = vmatpush2.msra.mxu0 %v115
  %258 = vmatprep.subr.mxu0 %v112
  %259 = vmatpush2.msra.mxu0 %v111
  %260 = vmatprep.subr.mxu0 %v108
  %261 = vmatpush2.msra.mxu0 %v107
  %262 = vmatprep.subr.mxu0 %v104
  %263 = vmatpush2.msra.mxu0 %v103
  %264 = vmatprep.subr.mxu0 %v100
  %265 = vmatpush2.msra.mxu0 %v99
  %266 = vmatprep.subr.mxu0 %v96
  %267 = vmatpush2.msra.mxu0 %v95
  %268 = vmatprep.subr.mxu0 %v92
  %269 = vmatpush2.msra.mxu0 %v91
  %270 = vmatprep.subr.mxu0 %v88
  %271 = vmatpush2.msra.mxu0 %v87
  %272 = vmatprep.subr.mxu0 %v84
  %273 = vmatpush2.msra.mxu0 %v83
  %274 = vmatprep.subr.mxu0 %v80
  %275 = vmatpush2.msra.mxu0 %v79
  %276 = vmatprep.mubr.f32.mxu0 %v12
  %277 = vmatmul.mubr.f32.gmra.mxu0 %v11
  %v278 = vpop.f32.mrf.mxu0
  %v279 = vadd.f32 0.0, %v278
  %v280 = vpop.f32.mrf.mxu0
  %v281 = vadd.f32 0.0, %v280
  %282 = vdwg.mxu0
  %v283 = vxor.u32 %v208, 2147483648
  %v284 = vmul.f32 %v283, 1.442695
  %v285 = vpow.pop %v284
  %v286 = vadd.f32 %v285, 1.0
  %v287 = vrcp.pop %v286
  %v288 = vmul.f32 1.0, %v287
  %v289 = vxor.u32 %v210, 2147483648
  %v290 = vmul.f32 %v289, 1.442695
  %v291 = vpow.pop %v290
  %v292 = vadd.f32 %v291, 1.0
  %v293 = vrcp.pop %v292
  %v294 = vmul.f32 1.0, %v293
  %v295 = vmul.f32 %v288, %v281
  %v296 = vadd.f32 %v279, %v295
  %v297 = vtanh.pop %v296
  %v298 = vsub.f32 1.0, %v294
  %v299 = vmul.f32 %v298, %v297
  %v300 = vmul.f32 %v294, %v11
  %v301 = vadd.f32 %v299, %v300
  %302 = vst [vmem:[%s2] sm:$0xff] %v301
  // Predicated region
  $region10: #{gru_cell.1} parent=0 // pred_check
    _
  $region11: #{gru_cell.1} parent=0 // pred_check_branch
    %304 = sbr.rel (0) target = $region13
  $region12: #{gru_cell.1} parent=0 // pred_region
    _
  $region13: #{gru_cell.1} parent=0 // pred_fallthru
    _
  // Predicated region
  $region14: #{gru_cell.1} parent=0 // pred_check
    _
  $region15: #{gru_cell.1} parent=0 // pred_check_branch
    %306 = sbr.rel (0) target = $region17
  $region16: #{gru_cell.1} parent=0 // pred_region
    _
  $region17: #{gru_cell.1} parent=0 // pred_fallthru
    _

</llo_original>
